<compile_context>
chip_gen: v7x
topology: tpu7x:2x2x1
jax: 0.10.0
libtpu: 0.0.40
codegen_flags: <defaults>
</compile_context>

<pallas_src>
import jax
import jax.numpy as jnp
from jax.experimental import pallas as pl
from jax.experimental.pallas import tpu as pltpu


def _round_up(x, m):
    return (x + m - 1) // m * m


def _tpu_vmem_capacity_bytes():
    try:
        info = pltpu.get_tpu_info()
        cap = getattr(info, "vmem_capacity_bytes", None)
        if cap:
            return int(cap)
    except Exception:
        pass
    return 64 << 20  # conservative fallback (v7x per-TC VMEM)


_ROW_BLOCK = 8      # sublane-aligned store block for the VMEM path
_PREFETCH_K = 8     # outstanding row DMAs for the HBM path


# ---------------------------------------------------------------------------
# Path A: small table, VMEM-resident (single buffer), 8-row-blocked gather.
# ---------------------------------------------------------------------------
def _lm_gather_vmem_kernel(ids_ref, table_ref, out_ref):
    # ids_ref   : SMEM (N_pad,) int32   token id, or -1 for post-pad positions
    # table_ref : VMEM (V, D)  float32  whole table, single-buffered
    # out_ref   : VMEM (TR, D) float32
    tr, d = out_ref.shape
    v_rows = table_ref.shape[0]
    base = pl.program_id(0) * tr
    R = _ROW_BLOCK

    # Hoisted constant (JAX does not CSE broadcast_in_dim inside loops).
    sub_iota = jax.lax.broadcasted_iota(jnp.int32, (R, d), 0)

    def body(j, carry):
        j8 = pl.multiple_of(j * R, R)
        blk = jnp.zeros((R, d), jnp.float32)
        for r in range(R):                          # static 8-row unroll
            raw = ids_ref[base + j8 + r]            # scalar from SMEM
            valid = (raw >= 0).astype(jnp.float32)  # post-pad mask scalar
            row_id = jnp.clip(raw, 0, v_rows - 1)   # clamp OOR / -1 ids
            row = table_ref[pl.ds(row_id, 1), :] * valid        # (1, D)
            blk = jnp.where(sub_iota == r, row, blk)            # place row r
        out_ref[pl.ds(j8, R), :] = blk              # one aligned (8, D) store
        return carry

    jax.lax.fori_loop(0, tr // R, body, 0, unroll=(tr // R) <= 16)


# ---------------------------------------------------------------------------
# Path B: large table stays in HBM; deep (K-outstanding) row-DMA gather that
# writes directly into the output tile; pad rows skip the DMA.
# ---------------------------------------------------------------------------
def _lm_gather_hbm_kernel(ids_ref, table_hbm, out_ref, sem):
    # ids_ref   : SMEM (N_pad,) int32   token id, or -1 for post-pad positions
    # table_hbm : ANY  (V, D)  float32  never copied wholesale into VMEM
    # out_ref   : VMEM (TR, D) float32
    # sem       : DMA semaphores (K,)
    tr, d = out_ref.shape
    v_rows = table_hbm.shape[0]
    base = pl.program_id(0) * tr
    K = _PREFETCH_K

    zrow = jnp.zeros((1, d), jnp.float32)           # hoisted constant

    def row_copy(i):
        # Identical descriptor used for start() and wait() (same src slice,
        # same dst slice, same semaphore slot).
        row_id = jnp.clip(ids_ref[base + i], 0, v_rows - 1)
        return pltpu.make_async_copy(
            table_hbm.at[pl.ds(row_id, 1)],         # (1, D) row in HBM
            out_ref.at[pl.ds(i, 1)],                # straight into output tile
            sem.at[i & (K - 1)],
        )

    def issue(i):
        raw = ids_ref[base + i]

        @pl.when(raw >= 0)
        def _():
            row_copy(i).start()

        @pl.when(raw < 0)
        def _():
            out_ref[pl.ds(i, 1), :] = zrow          # pad row: no DMA at all

    def drain(i):
        @pl.when(ids_ref[base + i] >= 0)
        def _():
            row_copy(i).wait()

    # Prime up to K outstanding row DMAs.
    @pl.loop(0, min(K, tr))
    def _(i):
        issue(i)

    # Steady state: retire the oldest in-flight row, then issue K rows ahead.
    @pl.loop(K, tr)
    def _(i):
        drain(i - K)
        issue(i)

    # Retire the tail before the body ends (output writeback needs the data).
    @pl.loop(max(tr - K, 0), tr)
    def _(i):
        drain(i)


# ---------------------------------------------------------------------------
# Wrapper: PreEmbeddedLM.forward equivalent (file-backed emb_dict case).
# ---------------------------------------------------------------------------
def pre_embedded_lm_forward(token_ids, lengths, emb_table, *,
                            row_tile=None,
                            table_vmem_budget_bytes=None,
                            force_hbm_table=False):
    """token_ids: [B, L] int32 post-padded token indices into emb_table
       lengths:   [B]    int32 true length of each sequence
       emb_table: [V, D] float32 stand-in for the pre-computed emb_dict rows
       returns (embs [B, L, D] float32, heads=None)"""
    B, L = token_ids.shape
    V, D = emb_table.shape
    N = B * L

    # Generation-tuned budgets (v5e/v6e: 128 MiB VMEM; v7x: 64 MiB per TC).
    vmem_cap = _tpu_vmem_capacity_bytes()
    big_vmem = vmem_cap >= (96 << 20)
    if table_vmem_budget_bytes is None:
        table_vmem_budget_bytes = (48 << 20) if big_vmem else (20 << 20)
    if row_tile is None:
        row_tile = 2048 if big_vmem else (1024 if D <= 512 else 512)
    row_tile = max(_ROW_BLOCK, _round_up(row_tile, _ROW_BLOCK))

    # Row tile: as large as possible to amortize per-grid-step overhead, but
    # sized so the grid has >= 2 steps when possible ("parallel" axis can then
    # span both TensorCores on v7x).
    half = _round_up(max(-(-N // 2), 1), _ROW_BLOCK)
    tr = min(row_tile, max(half, _ROW_BLOCK))
    n_pad = _round_up(N, tr)
    grid = n_pad // tr

    table = emb_table.astype(jnp.float32)

    # Single scalar-prefetch array (halves SMEM footprint): token id for valid
    # positions, -1 for post-pad positions (the kernels derive the 0-mask from
    # the sign and clamp the id before the gather).
    ids = token_ids.reshape(N).astype(jnp.int32)
    pos = jnp.arange(L, dtype=jnp.int32)[None, :]
    valid = pos < lengths.astype(jnp.int32)[:, None]
    ids = jnp.where(valid.reshape(N), ids, jnp.int32(-1))
    if n_pad > N:
        ids = jnp.concatenate([ids, jnp.full((n_pad - N,), -1, jnp.int32)])

    table_bytes = V * D * 4
    out_tile_bytes = tr * D * 4
    headroom = 8 << 20
    vmem_ceiling = (vmem_cap * 7) // 8    # always leave headroom below physical

    use_vmem_table = (not force_hbm_table) and (
        table_bytes <= table_vmem_budget_bytes
        and table_bytes + 2 * out_tile_bytes + headroom <= vmem_ceiling)

    if use_vmem_table:
        # Table resident in VMEM once (constant index_map + single buffer).
        vmem_limit = int(min(vmem_ceiling,
                             table_bytes + 2 * out_tile_bytes + headroom))
        embs_flat = pl.pallas_call(
            _lm_gather_vmem_kernel,
            out_shape=jax.ShapeDtypeStruct((n_pad, D), jnp.float32),
            grid_spec=pltpu.PrefetchScalarGridSpec(
                num_scalar_prefetch=1,                  # packed ids -> SMEM
                grid=(grid,),
                in_specs=[
                    pl.BlockSpec((V, D), lambda t, ids_s: (0, 0),
                                 pipeline_mode=pl.Buffered(1)),
                ],
                out_specs=pl.BlockSpec((tr, D), lambda t, ids_s: (t, 0)),
            ),
            compiler_params=pltpu.CompilerParams(
                dimension_semantics=("parallel",),
                vmem_limit_bytes=vmem_limit),
        )(ids, table)
    else:
        # Table stays in HBM; only the output tiles (+ sems) live in VMEM.
        vmem_limit = int(min(vmem_ceiling, 2 * out_tile_bytes + headroom))
        embs_flat = pl.pallas_call(
            _lm_gather_hbm_kernel,
            out_shape=jax.ShapeDtypeStruct((n_pad, D), jnp.float32),
            grid_spec=pltpu.PrefetchScalarGridSpec(
                num_scalar_prefetch=1,                  # packed ids -> SMEM
                grid=(grid,),
                in_specs=[pl.BlockSpec(memory_space=pl.ANY)],
                out_specs=pl.BlockSpec((tr, D), lambda t, ids_s: (t, 0)),
                scratch_shapes=[pltpu.SemaphoreType.DMA((_PREFETCH_K,))],
            ),
            compiler_params=pltpu.CompilerParams(
                dimension_semantics=("parallel",),
                vmem_limit_bytes=vmem_limit),
        )(ids, table)

    embs = embs_flat[:N].reshape(B, L, D)

    # emb_dict entries here are plain per-token embedding arrays, so the
    # tuple/(embs, heads) branch is not taken -> heads is None.
    # TODO(synk): the `heads` (pad_matrices) branch has no numeric path to
    # implement without the head matrices themselves.
    heads = None
    return embs, heads


if __name__ == "__main__":
    key = jax.random.PRNGKey(0)
    # D = 128 (multiple of 128 -> lane-dense, unmasked output stores; real LM
    # hidden sizes 768/1024 are also multiples of 128).
    B, L, V, D = 2, 8, 64, 128
    k1, k2 = jax.random.split(key, 2)

    # Deterministic synthetic "pre-computed LM embedding" table.
    emb_table = jax.random.normal(k1, (V, D), dtype=jnp.float32)

    # Two variable-length token sequences (lengths 8 and 5), post-padded.
    lengths = jnp.array([8, 5], dtype=jnp.int32)
    token_ids = jax.random.randint(k2, (B, L), 0, V, dtype=jnp.int32)
    pos = jnp.arange(L)[None, :]
    valid_mask = pos < lengths[:, None]
    token_ids = jnp.where(valid_mask, token_ids, 0)

    # Small-table path (VMEM-resident, single-buffered table, 8-row gather).
    embs_vmem, heads = pre_embedded_lm_forward(token_ids, lengths, emb_table)
    # Large-table path (table stays in HBM, deep row-DMA gather straight into
    # the output tile), forced here so both code paths are exercised.
    embs_hbm, _ = pre_embedded_lm_forward(token_ids, lengths, emb_table,
                                          force_hbm_table=True)
    jax.block_until_ready((embs_vmem, embs_hbm))

    # Plain-JAX reference of the same semantics (lookup + post-pad with zeros).
    ref = emb_table[token_ids] * valid_mask[..., None].astype(jnp.float32)

    assert embs_vmem.shape == (B, L, D) and embs_vmem.dtype == jnp.float32
    assert embs_hbm.shape == (B, L, D) and embs_hbm.dtype == jnp.float32
    assert heads is None
    assert jnp.allclose(embs_vmem, ref, atol=1e-6), "VMEM-path mismatch vs reference"
    assert jnp.allclose(embs_hbm, ref, atol=1e-6), "HBM-path mismatch vs reference"

    print("KERNEL_OK")
</pallas_src>

<mosaic_0001>
module attributes {stable_mosaic.version = 11 : i64} {
  func.func @_lm_gather_vmem_kernel(%arg0: i32, %arg1: memref<16xi32, #tpu.memory_space<smem>>, %arg2: memref<64x128xf32, #tpu.memory_space<vmem>>, %arg3: memref<8x128xf32, #tpu.memory_space<vmem>>) attributes {dimension_semantics = [#tpu.dimension_semantics<parallel>], iteration_bounds = array<i64: 2>, scalar_prefetch = 1 : i64, scratch_operands = 0 : i64, tpu.core_type = #tpu.core_type<tc>, window_params = [{pipeline_mode = #tpu.pipeline_mode<synchronous>, transform_indices = @transform_0, window_bounds = array<i64: 64, 128>}, {transform_indices = @transform_1, window_bounds = array<i64: 8, 128>}]} {
    %c8_i32 = arith.constant 8 : i32
    %0 = arith.muli %arg0, %c8_i32 : i32
    %1 = tpu.iota {dimensions = array<i32: 0>} : vector<8x128xi32>
    %c0_i32 = arith.constant 0 : i32
    %c8_i32_0 = arith.constant 8 : i32
    %2 = arith.muli %c0_i32, %c8_i32_0 : i32
    %3 = tpu.assume_multiple %2, 8 : i32
    %cst = arith.constant 0.000000e+00 : f32
    %4 = vector.broadcast %cst : f32 to vector<8x128xf32>
    %5 = arith.addi %0, %3 : i32
    %c0_i32_1 = arith.constant 0 : i32
    %6 = arith.addi %5, %c0_i32_1 : i32
    %7 = arith.index_cast %6 : i32 to index
    %8 = memref.load %arg1[%7] : memref<16xi32, #tpu.memory_space<smem>>
    %c0_i32_2 = arith.constant 0 : i32
    %9 = arith.cmpi sge, %8, %c0_i32_2 : i32
    %10 = arith.extui %9 : i1 to i32
    %11 = arith.sitofp %10 : i32 to f32
    %c0_i32_3 = arith.constant 0 : i32
    %c63_i32 = arith.constant 63 : i32
    %12 = arith.maxsi %c0_i32_3, %8 : i32
    %13 = arith.minsi %c63_i32, %12 : i32
    %14 = arith.index_cast %13 : i32 to index
    %c0 = arith.constant 0 : index
    %15 = vector.load %arg2[%14, %c0] : memref<64x128xf32, #tpu.memory_space<vmem>>, vector<1x128xf32>
    %16 = vector.broadcast %11 : f32 to vector<1x128xf32>
    %17 = arith.mulf %15, %16 : vector<1x128xf32>
    %c0_i32_4 = arith.constant 0 : i32
    %18 = vector.broadcast %c0_i32_4 : i32 to vector<8x128xi32>
    %19 = arith.cmpi eq, %1, %18 : vector<8x128xi32>
    %20 = vector.shape_cast %17 : vector<1x128xf32> to vector<1x128xf32>
    %21 = vector.broadcast %20 : vector<1x128xf32> to vector<8x128xf32>
    %22 = arith.select %19, %21, %4 : vector<8x128xi1>, vector<8x128xf32>
    %23 = arith.addi %0, %3 : i32
    %c1_i32 = arith.constant 1 : i32
    %24 = arith.addi %23, %c1_i32 : i32
    %25 = arith.index_cast %24 : i32 to index
    %26 = memref.load %arg1[%25] : memref<16xi32, #tpu.memory_space<smem>>
    %c0_i32_5 = arith.constant 0 : i32
    %27 = arith.cmpi sge, %26, %c0_i32_5 : i32
    %28 = arith.extui %27 : i1 to i32
    %29 = arith.sitofp %28 : i32 to f32
    %c0_i32_6 = arith.constant 0 : i32
    %c63_i32_7 = arith.constant 63 : i32
    %30 = arith.maxsi %c0_i32_6, %26 : i32
    %31 = arith.minsi %c63_i32_7, %30 : i32
    %32 = arith.index_cast %31 : i32 to index
    %c0_8 = arith.constant 0 : index
    %33 = vector.load %arg2[%32, %c0_8] : memref<64x128xf32, #tpu.memory_space<vmem>>, vector<1x128xf32>
    %34 = vector.broadcast %29 : f32 to vector<1x128xf32>
    %35 = arith.mulf %33, %34 : vector<1x128xf32>
    %c1_i32_9 = arith.constant 1 : i32
    %36 = vector.broadcast %c1_i32_9 : i32 to vector<8x128xi32>
    %37 = arith.cmpi eq, %1, %36 : vector<8x128xi32>
    %38 = vector.shape_cast %35 : vector<1x128xf32> to vector<1x128xf32>
    %39 = vector.broadcast %38 : vector<1x128xf32> to vector<8x128xf32>
    %40 = arith.select %37, %39, %22 : vector<8x128xi1>, vector<8x128xf32>
    %41 = arith.addi %0, %3 : i32
    %c2_i32 = arith.constant 2 : i32
    %42 = arith.addi %41, %c2_i32 : i32
    %43 = arith.index_cast %42 : i32 to index
    %44 = memref.load %arg1[%43] : memref<16xi32, #tpu.memory_space<smem>>
    %c0_i32_10 = arith.constant 0 : i32
    %45 = arith.cmpi sge, %44, %c0_i32_10 : i32
    %46 = arith.extui %45 : i1 to i32
    %47 = arith.sitofp %46 : i32 to f32
    %c0_i32_11 = arith.constant 0 : i32
    %c63_i32_12 = arith.constant 63 : i32
    %48 = arith.maxsi %c0_i32_11, %44 : i32
    %49 = arith.minsi %c63_i32_12, %48 : i32
    %50 = arith.index_cast %49 : i32 to index
    %c0_13 = arith.constant 0 : index
    %51 = vector.load %arg2[%50, %c0_13] : memref<64x128xf32, #tpu.memory_space<vmem>>, vector<1x128xf32>
    %52 = vector.broadcast %47 : f32 to vector<1x128xf32>
    %53 = arith.mulf %51, %52 : vector<1x128xf32>
    %c2_i32_14 = arith.constant 2 : i32
    %54 = vector.broadcast %c2_i32_14 : i32 to vector<8x128xi32>
    %55 = arith.cmpi eq, %1, %54 : vector<8x128xi32>
    %56 = vector.shape_cast %53 : vector<1x128xf32> to vector<1x128xf32>
    %57 = vector.broadcast %56 : vector<1x128xf32> to vector<8x128xf32>
    %58 = arith.select %55, %57, %40 : vector<8x128xi1>, vector<8x128xf32>
    %59 = arith.addi %0, %3 : i32
    %c3_i32 = arith.constant 3 : i32
    %60 = arith.addi %59, %c3_i32 : i32
    %61 = arith.index_cast %60 : i32 to index
    %62 = memref.load %arg1[%61] : memref<16xi32, #tpu.memory_space<smem>>
    %c0_i32_15 = arith.constant 0 : i32
    %63 = arith.cmpi sge, %62, %c0_i32_15 : i32
    %64 = arith.extui %63 : i1 to i32
    %65 = arith.sitofp %64 : i32 to f32
    %c0_i32_16 = arith.constant 0 : i32
    %c63_i32_17 = arith.constant 63 : i32
    %66 = arith.maxsi %c0_i32_16, %62 : i32
    %67 = arith.minsi %c63_i32_17, %66 : i32
    %68 = arith.index_cast %67 : i32 to index
    %c0_18 = arith.constant 0 : index
    %69 = vector.load %arg2[%68, %c0_18] : memref<64x128xf32, #tpu.memory_space<vmem>>, vector<1x128xf32>
    %70 = vector.broadcast %65 : f32 to vector<1x128xf32>
    %71 = arith.mulf %69, %70 : vector<1x128xf32>
    %c3_i32_19 = arith.constant 3 : i32
    %72 = vector.broadcast %c3_i32_19 : i32 to vector<8x128xi32>
    %73 = arith.cmpi eq, %1, %72 : vector<8x128xi32>
    %74 = vector.shape_cast %71 : vector<1x128xf32> to vector<1x128xf32>
    %75 = vector.broadcast %74 : vector<1x128xf32> to vector<8x128xf32>
    %76 = arith.select %73, %75, %58 : vector<8x128xi1>, vector<8x128xf32>
    %77 = arith.addi %0, %3 : i32
    %c4_i32 = arith.constant 4 : i32
    %78 = arith.addi %77, %c4_i32 : i32
    %79 = arith.index_cast %78 : i32 to index
    %80 = memref.load %arg1[%79] : memref<16xi32, #tpu.memory_space<smem>>
    %c0_i32_20 = arith.constant 0 : i32
    %81 = arith.cmpi sge, %80, %c0_i32_20 : i32
    %82 = arith.extui %81 : i1 to i32
    %83 = arith.sitofp %82 : i32 to f32
    %c0_i32_21 = arith.constant 0 : i32
    %c63_i32_22 = arith.constant 63 : i32
    %84 = arith.maxsi %c0_i32_21, %80 : i32
    %85 = arith.minsi %c63_i32_22, %84 : i32
    %86 = arith.index_cast %85 : i32 to index
    %c0_23 = arith.constant 0 : index
    %87 = vector.load %arg2[%86, %c0_23] : memref<64x128xf32, #tpu.memory_space<vmem>>, vector<1x128xf32>
    %88 = vector.broadcast %83 : f32 to vector<1x128xf32>
    %89 = arith.mulf %87, %88 : vector<1x128xf32>
    %c4_i32_24 = arith.constant 4 : i32
    %90 = vector.broadcast %c4_i32_24 : i32 to vector<8x128xi32>
    %91 = arith.cmpi eq, %1, %90 : vector<8x128xi32>
    %92 = vector.shape_cast %89 : vector<1x128xf32> to vector<1x128xf32>
    %93 = vector.broadcast %92 : vector<1x128xf32> to vector<8x128xf32>
    %94 = arith.select %91, %93, %76 : vector<8x128xi1>, vector<8x128xf32>
    %95 = arith.addi %0, %3 : i32
    %c5_i32 = arith.constant 5 : i32
    %96 = arith.addi %95, %c5_i32 : i32
    %97 = arith.index_cast %96 : i32 to index
    %98 = memref.load %arg1[%97] : memref<16xi32, #tpu.memory_space<smem>>
    %c0_i32_25 = arith.constant 0 : i32
    %99 = arith.cmpi sge, %98, %c0_i32_25 : i32
    %100 = arith.extui %99 : i1 to i32
    %101 = arith.sitofp %100 : i32 to f32
    %c0_i32_26 = arith.constant 0 : i32
    %c63_i32_27 = arith.constant 63 : i32
    %102 = arith.maxsi %c0_i32_26, %98 : i32
    %103 = arith.minsi %c63_i32_27, %102 : i32
    %104 = arith.index_cast %103 : i32 to index
    %c0_28 = arith.constant 0 : index
    %105 = vector.load %arg2[%104, %c0_28] : memref<64x128xf32, #tpu.memory_space<vmem>>, vector<1x128xf32>
    %106 = vector.broadcast %101 : f32 to vector<1x128xf32>
    %107 = arith.mulf %105, %106 : vector<1x128xf32>
    %c5_i32_29 = arith.constant 5 : i32
    %108 = vector.broadcast %c5_i32_29 : i32 to vector<8x128xi32>
    %109 = arith.cmpi eq, %1, %108 : vector<8x128xi32>
    %110 = vector.shape_cast %107 : vector<1x128xf32> to vector<1x128xf32>
    %111 = vector.broadcast %110 : vector<1x128xf32> to vector<8x128xf32>
    %112 = arith.select %109, %111, %94 : vector<8x128xi1>, vector<8x128xf32>
    %113 = arith.addi %0, %3 : i32
    %c6_i32 = arith.constant 6 : i32
    %114 = arith.addi %113, %c6_i32 : i32
    %115 = arith.index_cast %114 : i32 to index
    %116 = memref.load %arg1[%115] : memref<16xi32, #tpu.memory_space<smem>>
    %c0_i32_30 = arith.constant 0 : i32
    %117 = arith.cmpi sge, %116, %c0_i32_30 : i32
    %118 = arith.extui %117 : i1 to i32
    %119 = arith.sitofp %118 : i32 to f32
    %c0_i32_31 = arith.constant 0 : i32
    %c63_i32_32 = arith.constant 63 : i32
    %120 = arith.maxsi %c0_i32_31, %116 : i32
    %121 = arith.minsi %c63_i32_32, %120 : i32
    %122 = arith.index_cast %121 : i32 to index
    %c0_33 = arith.constant 0 : index
    %123 = vector.load %arg2[%122, %c0_33] : memref<64x128xf32, #tpu.memory_space<vmem>>, vector<1x128xf32>
    %124 = vector.broadcast %119 : f32 to vector<1x128xf32>
    %125 = arith.mulf %123, %124 : vector<1x128xf32>
    %c6_i32_34 = arith.constant 6 : i32
    %126 = vector.broadcast %c6_i32_34 : i32 to vector<8x128xi32>
    %127 = arith.cmpi eq, %1, %126 : vector<8x128xi32>
    %128 = vector.shape_cast %125 : vector<1x128xf32> to vector<1x128xf32>
    %129 = vector.broadcast %128 : vector<1x128xf32> to vector<8x128xf32>
    %130 = arith.select %127, %129, %112 : vector<8x128xi1>, vector<8x128xf32>
    %131 = arith.addi %0, %3 : i32
    %c7_i32 = arith.constant 7 : i32
    %132 = arith.addi %131, %c7_i32 : i32
    %133 = arith.index_cast %132 : i32 to index
    %134 = memref.load %arg1[%133] : memref<16xi32, #tpu.memory_space<smem>>
    %c0_i32_35 = arith.constant 0 : i32
    %135 = arith.cmpi sge, %134, %c0_i32_35 : i32
    %136 = arith.extui %135 : i1 to i32
    %137 = arith.sitofp %136 : i32 to f32
    %c0_i32_36 = arith.constant 0 : i32
    %c63_i32_37 = arith.constant 63 : i32
    %138 = arith.maxsi %c0_i32_36, %134 : i32
    %139 = arith.minsi %c63_i32_37, %138 : i32
    %140 = arith.index_cast %139 : i32 to index
    %c0_38 = arith.constant 0 : index
    %141 = vector.load %arg2[%140, %c0_38] : memref<64x128xf32, #tpu.memory_space<vmem>>, vector<1x128xf32>
    %142 = vector.broadcast %137 : f32 to vector<1x128xf32>
    %143 = arith.mulf %141, %142 : vector<1x128xf32>
    %c7_i32_39 = arith.constant 7 : i32
    %144 = vector.broadcast %c7_i32_39 : i32 to vector<8x128xi32>
    %145 = arith.cmpi eq, %1, %144 : vector<8x128xi32>
    %146 = vector.shape_cast %143 : vector<1x128xf32> to vector<1x128xf32>
    %147 = vector.broadcast %146 : vector<1x128xf32> to vector<8x128xf32>
    %148 = arith.select %145, %147, %130 : vector<8x128xi1>, vector<8x128xf32>
    %149 = arith.index_cast %3 : i32 to index
    %c0_40 = arith.constant 0 : index
    %150 = vector.load %arg3[%149, %c0_40] : memref<8x128xf32, #tpu.memory_space<vmem>>, vector<8x128xf32>
    tpu.vector_store %arg3[%149, %c0_40], %148 {strides = array<i32>} : memref<8x128xf32, #tpu.memory_space<vmem>>, vector<8x128xf32>,
    %c1_i32_41 = arith.constant 1 : i32
    return
  }
  func.func @transform_0(%arg0: i32, %arg1: memref<16xi32, #tpu.memory_space<smem>>) -> (i32, i32) {
    %c0_i32 = arith.constant 0 : i32
    %c0_i32_0 = arith.constant 0 : i32
    %c0_i32_1 = arith.constant 0 : i32
    return %c0_i32, %c0_i32_0 : i32, i32
  }
  func.func @transform_1(%arg0: i32, %arg1: memref<16xi32, #tpu.memory_space<smem>>) -> (i32, i32) {
    %c0_i32 = arith.constant 0 : i32
    %c0_i32_0 = arith.constant 0 : i32
    return %arg0, %c0_i32 : i32, i32
  }
}

</mosaic_0001>

<llo_original>
// kernel: tpu_custom_call.1
$region0: #{tpu_custom_call.1}
  #allocation0 [shape = 'u32[]', space=smem, size = 0x4, offset = 0x4, fixed_abs, tag = 'smem constant byte address 0x4 - core index']
  #allocation1 [shape = 'u32[144,128]{1,0:T(1,128)}', space=vmem, size = 0x12000, scoped, tag = 'internal scratch']
  #allocation2 [shape = 's32[1]{0}', space=sflag, size = 0x4, scoped, tag = 'scoped memory for tpu_custom_call.1']
  #allocation3 [shape = 'u8[512]{0}', space=smem, size = 0x200, scoped, tag = 'prefetched SMEM operand 0']
  %s0 = inlined_call_operand.hbm [shape: s32[16], index: 0, kind: input, shape index: {}]
  %s1 = inlined_call_operand.hbm [shape: f32[64,128], index: 1, kind: input, shape index: {}]
  %s2 = inlined_call_operand.hbm [shape: f32[16,128], index: 2, kind: output, shape index: {}]
  %s3 = sld [smem:[#allocation0]]
  $region41: #{tpu_custom_call.1} parent=0
    _
  %s5 = ssub.s32 1, %s3
  %s6 = scalar_select 0, %s5, %s3
  %8 = dma.hbm_to_smem %s0, 16, [#allocation3], [#allocation2]
  %9 = dma.done [#allocation2], 16
  %10 = sfence
  $region1: #{tpu_custom_call.1} parent=0
    #allocation4 [shape = 'u8[32768]{0}', space=vmem, size = 0x8000, scoped, tag = 'input window, operand 1, single buffered']
    #allocation5 [shape = 's32[2]{0}', space=sflag, size = 0x8, scoped, tag = 'scoped memory for tpu_custom_call.1']
    #allocation6 [shape = 's32[2]{0}', space=sflag, size = 0x8, scoped, tag = 'scoped memory for tpu_custom_call.1']
    #allocation7 [shape = 'u8[8192]{0}', space=vmem, size = 0x2000, scoped, tag = 'output window, operand 0']
    %11 = vsyncpa [#allocation5], 0
    %12 = vsyncpa [#allocation6], 0
    %s13 = scalar_lea.sflag [#allocation6], 1
    %14 = vsyncpa %s13, 0
    loop: start=0, step=1, limit=4
    $region2: #{tpu_custom_call.1} parent=1 // loop_pre_header
      _
    $region3: #{tpu_custom_call.1} parent=1 // loop_header
      %s16 = sphi 0, %s20
      %p17 = scmp.ge.s32.totalorder %s16, 4
      %s24 = sphi 0, %s24
      %s26 = sphi 0, %s24
      %s27 = sphi 0, %s26
      %s41 = sphi 0, %s27
      %s47 = sphi 0, %s49
      %s50 = sphi 0, %s47
      %s51 = sphi 0, %s50
      %s67 = sphi 0, %s51
    $region4: #{tpu_custom_call.1} parent=1 // loop_header_branch
      %19 = sbr.rel (%p17) target = $region8
    $region5: #{tpu_custom_call.1} parent=1 // loop_body
      %s21 = ssub.s32 %s16, 1
      %s22 = ssub.s32 %s16, 2
      %s23 = sadd.s32 %s16, 1
      %s25 = sadd.s32 %s24, 1
      %p28 = scmp.eq.s32.totalorder %s16, 1
      %p29 = scmp.ne.s32.totalorder %s24, %s26
      %p30 = scmp.eq.s32.totalorder %s16, 0
      %p31 = por %p29, %p30
      %p32 = scmp.ne.s32.totalorder %s24, %s26
      %p33 = scmp.eq.s32.totalorder %s21, 1
      %p34 = por %p32, %p33
      %p35 = scmp.ne.s32.totalorder %s26, %s27
      %p36 = scmp.eq.s32.totalorder %s21, 0
      %p37 = por %p35, %p36
      %p38 = scmp.ne.s32.totalorder %s26, %s27
      %p39 = scmp.eq.s32.totalorder %s22, 1
      %p40 = por %p38, %p39
      %p42 = scmp.ne.s32.totalorder %s27, %s41
      %p43 = scmp.eq.s32.totalorder %s22, 0
      %p44 = por %p42, %p43
      %s45 = ssub.s32 %s16, %s23
      %p46 = scmp.eq.s32.totalorder %s45, 0
      %s48 = sadd.s32 %s47, 1
      %s49 = scalar_select %p46, %s47, %s48
      %p52 = pneg %p46
      %p53 = scmp.eq.s32.totalorder %s16, 1
      %p54 = por %p52, %p53
      %p55 = scmp.ne.s32.totalorder %s47, %s50
      %p56 = scmp.eq.s32.totalorder %s16, 0
      %p57 = por %p55, %p56
      %p58 = scmp.ne.s32.totalorder %s47, %s50
      %p59 = scmp.eq.s32.totalorder %s21, 1
      %p60 = por %p58, %p59
      %p61 = scmp.ne.s32.totalorder %s50, %s51
      %p62 = scmp.eq.s32.totalorder %s21, 0
      %p63 = por %p61, %p62
      %p64 = scmp.ne.s32.totalorder %s50, %s51
      %p65 = scmp.eq.s32.totalorder %s22, 1
      %p66 = por %p64, %p65
      %p68 = scmp.ne.s32.totalorder %s51, %s67
      %p69 = scmp.eq.s32.totalorder %s22, 0
      %p70 = por %p68, %p69
      %p71 = scmp.le.s32.totalorder 1, %s16
      %p72 = scmp.lt.s32.totalorder %s16, 3
      %p73 = pnand %p71, %p72
      %p74 = pneg %p73
      // Predicated region
      $region9: #{tpu_custom_call.1} parent=5 // pred_check
        _
      $region10: #{tpu_custom_call.1} parent=5 // pred_check_branch
        %76 = sbr.rel (%p73) target = $region12
      $region11: #{tpu_custom_call.1} parent=5 // pred_region
        %s77 = ssub.s32 %s16, 1
        // Predicated region
        $region13: #{tpu_custom_call.1} parent=11 // pred_check
          %p78 = pneg %p37
        $region14: #{tpu_custom_call.1} parent=11 // pred_check_branch
          %80 = sbr.rel (%p78) target = $region16
        $region15: #{tpu_custom_call.1} parent=11 // pred_region
          %s82 = ssub.s32 1024, 1024
          %83 = vsyncadd [#allocation5], %s82
          %s84 = sshll.u32 [#allocation4], 4
          %s85 = int_to_ptr.vmem [resolvable:$true] %s84
          %90 = dma.hbm_to_vmem [thread:$0]  %s1, 1024, %s85, [#allocation5], 128, 128, 8
        $region16: #{tpu_custom_call.1} parent=11 // pred_fallthru
          _
      $region12: #{tpu_custom_call.1} parent=5 // pred_fallthru
        _
      %p91 = scmp.lt.s32.totalorder %s16, 2
      // Predicated region
      $region17: #{tpu_custom_call.1} parent=5 // pred_check
        %p92 = pneg %p91
      $region18: #{tpu_custom_call.1} parent=5 // pred_check_branch
        %94 = sbr.rel (%p92) target = $region20
      $region19: #{tpu_custom_call.1} parent=5 // pred_region
        _
      $region20: #{tpu_custom_call.1} parent=5 // pred_fallthru
        _
      %p95 = scmp.le.s32.totalorder 1, %s16
      %p96 = scmp.lt.s32.totalorder %s16, 3
      %p97 = pnand %p95, %p96
      %p98 = pneg %p97
      // Predicated region
      $region21: #{tpu_custom_call.1} parent=5 // pred_check
        _
      $region22: #{tpu_custom_call.1} parent=5 // pred_check_branch
        %100 = sbr.rel (%p97) target = $region24
      $region23: #{tpu_custom_call.1} parent=5 // pred_region
        %s101 = ssub.s32 %s16, 1
        // Predicated region
        $region25: #{tpu_custom_call.1} parent=23 // pred_check
          %p102 = pneg %p37
        $region26: #{tpu_custom_call.1} parent=23 // pred_check_branch
          %104 = sbr.rel (%p102) target = $region28
        $region27: #{tpu_custom_call.1} parent=23 // pred_region
          %105 = dma.done [#allocation5], 1024
        $region28: #{tpu_custom_call.1} parent=23 // pred_fallthru
          _
        %p106 = pneg %p37
        %p107 = pneg %p34
        %p108 = pneg %p63
        %p109 = pneg %p60
        %s110 = sand.u32 %s50, 1
        %s111 = scalar_lea.sflag [#allocation6], %s110
        %s112 = sand.u32 %s50, 1
        %s113 = smul.addr %s112, 8
        %s114 = scalar_lea.vmem [#allocation7], %s113
        %s115 = smul.u32 %s21, 8
        %v116 = vlaneseq
        %v117 = vshrl.u32 %v116, 7
        %s118 = sadd.s32 %s115, 0
        %s119 = sld [smem:[#allocation3 + %s118]]
        %p120 = scmp.ge.s32.totalorder %s119, 0
        %s121 = scalar_select %p120, 1, 0
        %s122 = scvt.s32.f32 %s121
        %p123 = scmp.gt.s32.totalorder %s119, 0
        %s124 = scalar_select %p123, %s119, 0
        %p125 = scmp.lt.s32.totalorder %s124, 63
        %s126 = scalar_select %p125, %s124, 63
        %s127 = scalar_lea.vmem [#allocation4], %s126
        %v128 = vld [vmem:[%s127] sm:$0x1]
        %v129 = vstv %s122
        %v130 = vmul.f32 %v128, %v129
        %vm131 = vcmp.eq.s32.totalorder %v117, 0
        %v132 = vlaneseq
        %v133 = vshrl.u32 %v132, 7
        %v134 = vsub.s32 0, %v133
        %v135 = vrot.slane %v130, %v134
        %v136 = vsel %vm131, %v135, 0.0
        %s137 = sadd.s32 %s118, 1
        %s138 = sld [smem:[#allocation3 + %s137]]
        %p139 = scmp.ge.s32.totalorder %s138, 0
        %s140 = scalar_select %p139, 1, 0
        %s141 = scvt.s32.f32 %s140
        %p142 = scmp.gt.s32.totalorder %s138, 0
        %s143 = scalar_select %p142, %s138, 0
        %p144 = scmp.lt.s32.totalorder %s143, 63
        %s145 = scalar_select %p144, %s143, 63
        %s146 = scalar_lea.vmem [#allocation4], %s145
        %v147 = vld [vmem:[%s146] sm:$0x1]
        %v148 = vstv %s141
        %v149 = vmul.f32 %v147, %v148
        %vm150 = vcmp.eq.s32.totalorder %v117, 1
        %v151 = vlaneseq
        %v152 = vshrl.u32 %v151, 7
        %v153 = vsub.s32 0, %v152
        %v154 = vrot.slane %v149, %v153
        %v155 = vsel %vm150, %v154, %v136
        %s156 = sadd.s32 %s118, 2
        %s157 = sld [smem:[#allocation3 + %s156]]
        %p158 = scmp.ge.s32.totalorder %s157, 0
        %s159 = scalar_select %p158, 1, 0
        %s160 = scvt.s32.f32 %s159
        %p161 = scmp.gt.s32.totalorder %s157, 0
        %s162 = scalar_select %p161, %s157, 0
        %p163 = scmp.lt.s32.totalorder %s162, 63
        %s164 = scalar_select %p163, %s162, 63
        %s165 = scalar_lea.vmem [#allocation4], %s164
        %v166 = vld [vmem:[%s165] sm:$0x1]
        %v167 = vstv %s160
        %v168 = vmul.f32 %v166, %v167
        %vm169 = vcmp.eq.s32.totalorder %v117, 2
        %v170 = vlaneseq
        %v171 = vshrl.u32 %v170, 7
        %v172 = vsub.s32 0, %v171
        %v173 = vrot.slane %v168, %v172
        %v174 = vsel %vm169, %v173, %v155
        %s175 = sadd.s32 %s118, 3
        %s176 = sld [smem:[#allocation3 + %s175]]
        %p177 = scmp.ge.s32.totalorder %s176, 0
        %s178 = scalar_select %p177, 1, 0
        %s179 = scvt.s32.f32 %s178
        %p180 = scmp.gt.s32.totalorder %s176, 0
        %s181 = scalar_select %p180, %s176, 0
        %p182 = scmp.lt.s32.totalorder %s181, 63
        %s183 = scalar_select %p182, %s181, 63
        %s184 = scalar_lea.vmem [#allocation4], %s183
        %v185 = vld [vmem:[%s184] sm:$0x1]
        %v186 = vstv %s179
        %v187 = vmul.f32 %v185, %v186
        %vm188 = vcmp.eq.s32.totalorder %v117, 3
        %v189 = vlaneseq
        %v190 = vshrl.u32 %v189, 7
        %v191 = vsub.s32 0, %v190
        %v192 = vrot.slane %v187, %v191
        %v193 = vsel %vm188, %v192, %v174
        %s194 = sadd.s32 %s118, 4
        %s195 = sld [smem:[#allocation3 + %s194]]
        %p196 = scmp.ge.s32.totalorder %s195, 0
        %s197 = scalar_select %p196, 1, 0
        %s198 = scvt.s32.f32 %s197
        %p199 = scmp.gt.s32.totalorder %s195, 0
        %s200 = scalar_select %p199, %s195, 0
        %p201 = scmp.lt.s32.totalorder %s200, 63
        %s202 = scalar_select %p201, %s200, 63
        %s203 = scalar_lea.vmem [#allocation4], %s202
        %v204 = vld [vmem:[%s203] sm:$0x1]
        %v205 = vstv %s198
        %v206 = vmul.f32 %v204, %v205
        %vm207 = vcmp.eq.s32.totalorder %v117, 4
        %v208 = vlaneseq
        %v209 = vshrl.u32 %v208, 7
        %v210 = vsub.s32 0, %v209
        %v211 = vrot.slane %v206, %v210
        %v212 = vsel %vm207, %v211, %v193
        %s213 = sadd.s32 %s118, 5
        %s214 = sld [smem:[#allocation3 + %s213]]
        %p215 = scmp.ge.s32.totalorder %s214, 0
        %s216 = scalar_select %p215, 1, 0
        %s217 = scvt.s32.f32 %s216
        %p218 = scmp.gt.s32.totalorder %s214, 0
        %s219 = scalar_select %p218, %s214, 0
        %p220 = scmp.lt.s32.totalorder %s219, 63
        %s221 = scalar_select %p220, %s219, 63
        %s222 = scalar_lea.vmem [#allocation4], %s221
        %v223 = vld [vmem:[%s222] sm:$0x1]
        %v224 = vstv %s217
        %v225 = vmul.f32 %v223, %v224
        %vm226 = vcmp.eq.s32.totalorder %v117, 5
        %v227 = vlaneseq
        %v228 = vshrl.u32 %v227, 7
        %v229 = vsub.s32 0, %v228
        %v230 = vrot.slane %v225, %v229
        %v231 = vsel %vm226, %v230, %v212
        %s232 = sadd.s32 %s118, 6
        %s233 = sld [smem:[#allocation3 + %s232]]
        %p234 = scmp.ge.s32.totalorder %s233, 0
        %s235 = scalar_select %p234, 1, 0
        %s236 = scvt.s32.f32 %s235
        %p237 = scmp.gt.s32.totalorder %s233, 0
        %s238 = scalar_select %p237, %s233, 0
        %p239 = scmp.lt.s32.totalorder %s238, 63
        %s240 = scalar_select %p239, %s238, 63
        %s241 = scalar_lea.vmem [#allocation4], %s240
        %v242 = vld [vmem:[%s241] sm:$0x1]
        %v243 = vstv %s236
        %v244 = vmul.f32 %v242, %v243
        %vm245 = vcmp.eq.s32.totalorder %v117, 6
        %v246 = vlaneseq
        %v247 = vshrl.u32 %v246, 7
        %v248 = vsub.s32 0, %v247
        %v249 = vrot.slane %v244, %v248
        %v250 = vsel %vm245, %v249, %v231
        %s251 = sadd.s32 %s118, 7
        %s252 = sld [smem:[#allocation3 + %s251]]
        %p253 = scmp.ge.s32.totalorder %s252, 0
        %s254 = scalar_select %p253, 1, 0
        %s255 = scvt.s32.f32 %s254
        %p256 = scmp.gt.s32.totalorder %s252, 0
        %s257 = scalar_select %p256, %s252, 0
        %p258 = scmp.lt.s32.totalorder %s257, 63
        %s259 = scalar_select %p258, %s257, 63
        %s260 = scalar_lea.vmem [#allocation4], %s259
        %v261 = vld [vmem:[%s260] sm:$0x1]
        %v262 = vstv %s255
        %v263 = vmul.f32 %v261, %v262
        %vm264 = vcmp.eq.s32.totalorder %v117, 7
        %v265 = vlaneseq
        %v266 = vshrl.u32 %v265, 7
        %v267 = vsub.s32 0, %v266
        %v268 = vrot.slane %v263, %v267
        %v269 = vsel %vm264, %v268, %v250
        %270 = vst [vmem:[%s114] sm:$0xff] %v269
        %s271 = sand.u32 %s50, 1
        %s272 = scalar_lea.sflag [#allocation6], %s271
        %s273 = sand.u32 %s50, 1
        %s274 = smul.addr %s273, 8
        %s275 = scalar_lea.vmem [#allocation7], %s274
        // Predicated region
        $region29: #{tpu_custom_call.1} parent=23 // pred_check
          %p276 = pneg %p60
        $region30: #{tpu_custom_call.1} parent=23 // pred_check_branch
          %278 = sbr.rel (%p276) target = $region32
        $region31: #{tpu_custom_call.1} parent=23 // pred_region
          %s280 = ssub.s32 128, 128
          %281 = vsyncadd %s272, %s280
          %s282 = smul.addr %s21, 128
          %s283 = scalar_lea.hbm %s2, %s282
          %s285 = sshll.u32 %s275, 4
          %s286 = int_to_ptr.vmem [resolvable:$true] %s285
          %288 = dma.vmem_to_hbm [thread:$0]  %s286, 128, %s283, %s272
        $region32: #{tpu_custom_call.1} parent=23 // pred_fallthru
          _
      $region24: #{tpu_custom_call.1} parent=5 // pred_fallthru
        _
      %p289 = scmp.le.s32.totalorder 2, %s16
      // Predicated region
      $region33: #{tpu_custom_call.1} parent=5 // pred_check
        %p290 = pneg %p289
      $region34: #{tpu_custom_call.1} parent=5 // pred_check_branch
        %292 = sbr.rel (%p290) target = $region36
      $region35: #{tpu_custom_call.1} parent=5 // pred_region
        %s293 = ssub.s32 %s16, 2
        // Predicated region
        $region37: #{tpu_custom_call.1} parent=35 // pred_check
          %p294 = pneg %p66
        $region38: #{tpu_custom_call.1} parent=35 // pred_check_branch
          %296 = sbr.rel (%p294) target = $region40
        $region39: #{tpu_custom_call.1} parent=35 // pred_region
          %s297 = sand.u32 %s51, 1
          %s298 = scalar_lea.sflag [#allocation6], %s297
          %s299 = sand.u32 %s51, 1
          %s300 = smul.addr %s299, 8
          %s301 = scalar_lea.vmem [#allocation7], %s300
          %302 = dma.done %s298, 128
        $region40: #{tpu_custom_call.1} parent=35 // pred_fallthru
          _
      $region36: #{tpu_custom_call.1} parent=5 // pred_fallthru
        _
    $region6: #{tpu_custom_call.1} parent=1 // loop_footer
      %s20 = sadd.s32 1, %s16
    $region7: #{tpu_custom_call.1} parent=1 // loop_footer_branch
      %15 = sbr.rel target = $region3
    $region8: #{tpu_custom_call.1} parent=1 // loop_exit
      _
    %303 = vsyncpa [#allocation5], 1
    %s304 = scalar_lea.sflag [#allocation5], 1
    %305 = vsyncpa %s304, 1
    %306 = vsyncpa [#allocation6], 1
    %s307 = scalar_lea.sflag [#allocation6], 1
    %308 = vsyncpa %s307, 1

</llo_original>
